<compile_context>
chip_gen: v7x
topology: tpu7x:2x2x1
jax: 0.10.0
libtpu: 0.0.40
codegen_flags: <defaults>
</compile_context>

<pallas_src>
import jax
import jax.numpy as jnp
from jax.experimental import pallas as pl
from jax.experimental.pallas import tpu as pltpu

HIDDEN = 64  # nn.LazyLinear(64) x3
OUT = 1      # final nn.LazyLinear(1)


def _round_up(x, m):
    return ((x + m - 1) // m) * m


def _pick_tile_b(B, D):
    """Batch tile (lane axis): multiple of 128, as large as a conservative VMEM
    budget allows (target 2048-8192), capped so the grid has >=2 steps when the
    batch permits (v7x has 2 TensorCores)."""
    Bp0 = _round_up(B, 128)
    # Per-batch-column VMEM (bytes): double-buffered f32 x block, sublane-padded
    # f32 y block, in-kernel bf16 copy of x, live f32/bf16 hidden intermediates.
    per_col = (2 * D * 4) + (2 * 8 * 4) + (2 * D * 2) + HIDDEN * (4 + 4 + 2 + 2)
    budget = 16 << 20                       # safe on v7x (64 MiB phys) and v5e (limit raised explicitly)
    cap = max(128, (budget // per_col) // 128 * 128)
    tile = min(8192, cap, Bp0)
    if Bp0 >= 256:                          # ensure >=2 grid steps -> both v7x cores busy
        tile = min(tile, max(128, (Bp0 // 2) // 128 * 128))
    return max(128, (tile // 128) * 128)


def _make_policy_kernel(cd, bf16_tanh):
    def act(h_f32, b):
        z = h_f32 + b                                      # f32 bias add (VPU)
        if bf16_tanh:
            return jnp.tanh(z.astype(cd))                  # packed bf16 tanh on the EUP (v6e/v7x)
        return jnp.tanh(z).astype(cd)                      # f32 tanh, cast for next MXU matmul

    def kernel(x_ref, w1_ref, w2_ref, w3_ref, w4t_ref, b_ref, o_ref):
        x = x_ref[...].astype(cd)                          # (tile_b, D): cast on VPU (slack)
        # Layer 1: contract both minor dims ('q @ k.T' pattern) -> (64, tile_b),
        # batch lands on lanes; no wrapper-side transpose needed.
        h = jnp.einsum('hd,bd->hb', w1_ref[...], x,
                       preferred_element_type=jnp.float32)
        h = act(h, b_ref[:, 0:1])
        h = jnp.dot(w2_ref[...], h, preferred_element_type=jnp.float32)
        h = act(h, b_ref[:, 1:2])
        h = jnp.dot(w3_ref[...], h, preferred_element_type=jnp.float32)
        h = act(h, b_ref[:, 2:3])
        # Layer 4: (1,64)@(64,tile_b) wastes the MXU -> VPU mul + XLU sublane reduce.
        y = jnp.sum(w4t_ref[...] * h.astype(jnp.float32), axis=0, keepdims=True)
        o_ref[...] = y + b_ref[0:OUT, 3:4]                 # (1, tile_b) lane-dense store

    return kernel


def _mlp_chain(x, params, *, use_bf16=True, bf16_tanh=True):
    """Plain-JAX path: reference for correctness AND the small-batch fast path."""
    cd = jnp.bfloat16 if use_bf16 else jnp.float32
    h = x.astype(cd)
    for i in (1, 2, 3):
        w = params[f"w{i}"].astype(cd)
        z = jnp.dot(h, w.T, preferred_element_type=jnp.float32) + params[f"b{i}"].reshape(1, -1)
        h = jnp.tanh(z.astype(cd)) if bf16_tanh else jnp.tanh(z).astype(cd)
    return (jnp.dot(h.astype(jnp.float32), params["w4"].astype(jnp.float32).T)
            + params["b4"].reshape(1, -1))


def policy_forward(x, params, *, tile_b=None, use_bf16=True, bf16_tanh=True,
                   use_kernel=None, min_kernel_batch=512):
    """x: (B, D) float32.  params: w1..w4 PyTorch-native (out, in), b1..b4 (out,)."""
    B, D = x.shape
    if use_kernel is None:
        use_kernel = B >= min_kernel_batch
    if not use_kernel:
        # Small-B fast path: kernel would be pure launch/padding overhead.
        return _mlp_chain(x, params, use_bf16=use_bf16, bf16_tanh=bf16_tanh)

    cd = jnp.bfloat16 if use_bf16 else jnp.float32
    if tile_b is None:
        tile_b = _pick_tile_b(B, D)
    assert tile_b % 128 == 0, "batch tile must be a multiple of 128 (lane width)"

    Bp = _round_up(B, tile_b)
    xp = x if Bp == B else jnp.pad(x, ((0, Bp - B), (0, 0)))   # pad rows only; no transpose/cast pass

    w1 = params["w1"].astype(cd)                 # (64, D)
    w2 = params["w2"].astype(cd)                 # (64, 64)
    w3 = params["w3"].astype(cd)                 # (64, 64)
    w4t = params["w4"].astype(jnp.float32).T     # (64, 1) for the VPU/XLU final layer

    # Pack the four biases into one f32 block: column j = bias of layer j+1
    # (b4 occupies row 0 of column 3).
    bpack = jnp.zeros((HIDDEN, 4), jnp.float32)
    bpack = (bpack.at[:, 0].set(params["b1"].astype(jnp.float32))
                  .at[:, 1].set(params["b2"].astype(jnp.float32))
                  .at[:, 2].set(params["b3"].astype(jnp.float32))
                  .at[:OUT, 3].set(params["b4"].astype(jnp.float32)))

    grid = (Bp // tile_b,)
    full = lambda i: (0, 0)
    in_specs = [
        pl.BlockSpec((tile_b, D), lambda i: (i, 0)),     # x: batch-tiled, untransposed f32
        pl.BlockSpec((HIDDEN, D), full),                 # w1
        pl.BlockSpec((HIDDEN, HIDDEN), full),            # w2
        pl.BlockSpec((HIDDEN, HIDDEN), full),            # w3
        pl.BlockSpec((HIDDEN, OUT), full),               # w4^T
        pl.BlockSpec((HIDDEN, 4), full),                 # packed biases
    ]
    out_specs = pl.BlockSpec((OUT, tile_b), lambda i: (0, i))

    yt = pl.pallas_call(
        _make_policy_kernel(cd, bf16_tanh),
        out_shape=jax.ShapeDtypeStruct((OUT, Bp), jnp.float32),
        grid=grid,
        in_specs=in_specs,
        out_specs=out_specs,
        compiler_params=pltpu.CompilerParams(
            dimension_semantics=("parallel",),           # batch tiles shard across TCs (v7x)
            vmem_limit_bytes=48 << 20),                  # > v5e's 16 MiB default, < v7x's 64 MiB physical
    )(xp, w1, w2, w3, w4t, bpack)

    return jnp.transpose(yt[:, :B])                      # (B, 1)


def init_params(key, in_features):
    """PyTorch Linear-style init: U(-1/sqrt(fan_in), +1/sqrt(fan_in)),
    weights stored (out_features, in_features), biases (out_features,)."""
    dims = [(in_features, HIDDEN), (HIDDEN, HIDDEN), (HIDDEN, HIDDEN), (HIDDEN, OUT)]
    params = {}
    for idx, (fan_in, fan_out) in enumerate(dims, start=1):
        key, kw, kb = jax.random.split(key, 3)
        bound = 1.0 / jnp.sqrt(jnp.float32(fan_in))
        params[f"w{idx}"] = jax.random.uniform(
            kw, (fan_out, fan_in), jnp.float32, -bound, bound)
        params[f"b{idx}"] = jax.random.uniform(
            kb, (fan_out,), jnp.float32, -bound, bound)
    return params


if __name__ == "__main__":
    key = jax.random.PRNGKey(0)
    k_x1, k_x2, k_p = jax.random.split(key, 3)

    D = 24                      # not a multiple of 16: exercises bf16 packing / full-dim BlockSpecs
    params = init_params(k_p, D)

    # Case 1: tiny batch, forced through the Pallas kernel (pads 8 -> 128 lanes).
    B1 = 8
    x1 = jax.random.normal(k_x1, (B1, D), jnp.float32)
    out1 = jax.block_until_ready(policy_forward(x1, params, use_kernel=True))
    ref1 = _mlp_chain(x1, params)
    assert out1.shape == (B1, 1)
    assert jnp.allclose(out1, ref1, atol=5e-2, rtol=5e-2), "mismatch vs JAX reference (B=8)"

    # Case 2: non-tile-multiple batch -> row padding + multi-step "parallel" grid.
    B2 = 300
    x2 = jax.random.normal(k_x2, (B2, D), jnp.float32)
    out2 = jax.block_until_ready(policy_forward(x2, params, use_kernel=True))
    ref2 = _mlp_chain(x2, params)
    assert out2.shape == (B2, 1)
    assert jnp.allclose(out2, ref2, atol=5e-2, rtol=5e-2), "mismatch vs JAX reference (B=300)"

    print("KERNEL_OK")
</pallas_src>

<mosaic_0001>
module attributes {stable_mosaic.version = 11 : i64} {
  func.func @kernel(%arg0: i32, %arg1: memref<128x24xf32, #tpu.memory_space<vmem>>, %arg2: memref<64x24xbf16, #tpu.memory_space<vmem>>, %arg3: memref<64x64xbf16, #tpu.memory_space<vmem>>, %arg4: memref<64x64xbf16, #tpu.memory_space<vmem>>, %arg5: memref<64x1xf32, #tpu.memory_space<vmem>>, %arg6: memref<64x4xf32, #tpu.memory_space<vmem>>, %arg7: memref<1x128xf32, #tpu.memory_space<vmem>>) attributes {dimension_semantics = [#tpu.dimension_semantics<parallel>], iteration_bounds = array<i64: 1>, scalar_prefetch = 0 : i64, scratch_operands = 0 : i64, tpu.core_type = #tpu.core_type<tc>, window_params = [{transform_indices = @transform_0, window_bounds = array<i64: 128, 24>}, {pipeline_mode = #tpu.pipeline_mode<synchronous>, transform_indices = @transform_1, window_bounds = array<i64: 64, 24>}, {pipeline_mode = #tpu.pipeline_mode<synchronous>, transform_indices = @transform_2, window_bounds = array<i64: 64, 64>}, {pipeline_mode = #tpu.pipeline_mode<synchronous>, transform_indices = @transform_3, window_bounds = array<i64: 64, 64>}, {pipeline_mode = #tpu.pipeline_mode<synchronous>, transform_indices = @transform_4, window_bounds = array<i64: 64, 1>}, {pipeline_mode = #tpu.pipeline_mode<synchronous>, transform_indices = @transform_5, window_bounds = array<i64: 64, 4>}, {transform_indices = @transform_6, window_bounds = array<i64: 1, 128>}]} {
    %c0 = arith.constant 0 : index
    %c0_0 = arith.constant 0 : index
    %0 = vector.load %arg1[%c0, %c0_0] : memref<128x24xf32, #tpu.memory_space<vmem>>, vector<128x24xf32>
    %1 = arith.truncf %0 : vector<128x24xf32> to vector<128x24xbf16>
    %c0_1 = arith.constant 0 : index
    %c0_2 = arith.constant 0 : index
    %2 = vector.load %arg2[%c0_1, %c0_2] : memref<64x24xbf16, #tpu.memory_space<vmem>>, vector<64x24xbf16>
    "tpu.trace_start"() <{level = 10 : i32, message = "hd,bd->hb"}> : () -> ()
    %cst = arith.constant dense<0.000000e+00> : vector<64x128xf32>
    %3 = tpu.matmul %2, %1, %cst {dimension_numbers = #tpu.dot_dimension_numbers<[1], [1], [0], [0], [0, 0, 1, 0], [], []>} : vector<64x24xbf16>, vector<128x24xbf16>, vector<64x128xf32> -> vector<64x128xf32>
    "tpu.trace_stop"() : () -> ()
    %c0_3 = arith.constant 0 : index
    %c0_4 = arith.constant 0 : index
    %4 = vector.load %arg6[%c0_3, %c0_4] : memref<64x4xf32, #tpu.memory_space<vmem>>, vector<64x1xf32>
    %5 = vector.broadcast %4 : vector<64x1xf32> to vector<64x128xf32>
    %6 = arith.addf %3, %5 : vector<64x128xf32>
    %7 = arith.truncf %6 : vector<64x128xf32> to vector<64x128xbf16>
    %8 = math.tanh %7 : vector<64x128xbf16>
    %c0_5 = arith.constant 0 : index
    %c0_6 = arith.constant 0 : index
    %9 = vector.load %arg3[%c0_5, %c0_6] : memref<64x64xbf16, #tpu.memory_space<vmem>>, vector<64x64xbf16>
    %cst_7 = arith.constant dense<0.000000e+00> : vector<64x128xf32>
    %10 = tpu.matmul %9, %8, %cst_7 {dimension_numbers = #tpu.dot_dimension_numbers<[1], [0], [0], [1], [0, 0, 1, 1], [], []>} : vector<64x64xbf16>, vector<64x128xbf16>, vector<64x128xf32> -> vector<64x128xf32>
    %c0_8 = arith.constant 0 : index
    %c1 = arith.constant 1 : index
    %11 = vector.load %arg6[%c0_8, %c1] : memref<64x4xf32, #tpu.memory_space<vmem>>, vector<64x1xf32>
    %12 = vector.broadcast %11 : vector<64x1xf32> to vector<64x128xf32>
    %13 = arith.addf %10, %12 : vector<64x128xf32>
    %14 = arith.truncf %13 : vector<64x128xf32> to vector<64x128xbf16>
    %15 = math.tanh %14 : vector<64x128xbf16>
    %c0_9 = arith.constant 0 : index
    %c0_10 = arith.constant 0 : index
    %16 = vector.load %arg4[%c0_9, %c0_10] : memref<64x64xbf16, #tpu.memory_space<vmem>>, vector<64x64xbf16>
    %cst_11 = arith.constant dense<0.000000e+00> : vector<64x128xf32>
    %17 = tpu.matmul %16, %15, %cst_11 {dimension_numbers = #tpu.dot_dimension_numbers<[1], [0], [0], [1], [0, 0, 1, 1], [], []>} : vector<64x64xbf16>, vector<64x128xbf16>, vector<64x128xf32> -> vector<64x128xf32>
    %c0_12 = arith.constant 0 : index
    %c2 = arith.constant 2 : index
    %18 = vector.load %arg6[%c0_12, %c2] : memref<64x4xf32, #tpu.memory_space<vmem>>, vector<64x1xf32>
    %19 = vector.broadcast %18 : vector<64x1xf32> to vector<64x128xf32>
    %20 = arith.addf %17, %19 : vector<64x128xf32>
    %21 = arith.truncf %20 : vector<64x128xf32> to vector<64x128xbf16>
    %22 = math.tanh %21 : vector<64x128xbf16>
    %c0_13 = arith.constant 0 : index
    %c0_14 = arith.constant 0 : index
    %23 = vector.load %arg5[%c0_13, %c0_14] : memref<64x1xf32, #tpu.memory_space<vmem>>, vector<64x1xf32>
    %24 = arith.extf %22 : vector<64x128xbf16> to vector<64x128xf32>
    %25 = vector.broadcast %23 : vector<64x1xf32> to vector<64x128xf32>
    %26 = arith.mulf %25, %24 : vector<64x128xf32>
    %cst_15 = arith.constant dense<0.000000e+00> : vector<128xf32>
    %27 = vector.multi_reduction <add>, %26, %cst_15 [0] : vector<64x128xf32> to vector<128xf32>
    %28 = vector.shape_cast %27 : vector<128xf32> to vector<1x128xf32>
    %c0_16 = arith.constant 0 : index
    %c3 = arith.constant 3 : index
    %29 = vector.load %arg6[%c0_16, %c3] : memref<64x4xf32, #tpu.memory_space<vmem>>, vector<1x1xf32>
    %30 = vector.broadcast %29 : vector<1x1xf32> to vector<1x128xf32>
    %31 = arith.addf %28, %30 : vector<1x128xf32>
    %c0_17 = arith.constant 0 : index
    %c0_18 = arith.constant 0 : index
    %32 = vector.load %arg7[%c0_17, %c0_18] : memref<1x128xf32, #tpu.memory_space<vmem>>, vector<1x128xf32>
    tpu.vector_store %arg7[%c0_17, %c0_18], %31 {strides = array<i32>} : memref<1x128xf32, #tpu.memory_space<vmem>>, vector<1x128xf32>,
    return
  }
  func.func @transform_0(%arg0: i32) -> (i32, i32) {
    %c0_i32 = arith.constant 0 : i32
    %c0_i32_0 = arith.constant 0 : i32
    return %arg0, %c0_i32 : i32, i32
  }
  func.func @transform_1(%arg0: i32) -> (i32, i32) {
    %c0_i32 = arith.constant 0 : i32
    %c0_i32_0 = arith.constant 0 : i32
    %c0_i32_1 = arith.constant 0 : i32
    return %c0_i32, %c0_i32_0 : i32, i32
  }
  func.func @transform_2(%arg0: i32) -> (i32, i32) {
    %c0_i32 = arith.constant 0 : i32
    %c0_i32_0 = arith.constant 0 : i32
    %c0_i32_1 = arith.constant 0 : i32
    return %c0_i32, %c0_i32_0 : i32, i32
  }
  func.func @transform_3(%arg0: i32) -> (i32, i32) {
    %c0_i32 = arith.constant 0 : i32
    %c0_i32_0 = arith.constant 0 : i32
    %c0_i32_1 = arith.constant 0 : i32
    return %c0_i32, %c0_i32_0 : i32, i32
  }
  func.func @transform_4(%arg0: i32) -> (i32, i32) {
    %c0_i32 = arith.constant 0 : i32
    %c0_i32_0 = arith.constant 0 : i32
    %c0_i32_1 = arith.constant 0 : i32
    return %c0_i32, %c0_i32_0 : i32, i32
  }
  func.func @transform_5(%arg0: i32) -> (i32, i32) {
    %c0_i32 = arith.constant 0 : i32
    %c0_i32_0 = arith.constant 0 : i32
    %c0_i32_1 = arith.constant 0 : i32
    return %c0_i32, %c0_i32_0 : i32, i32
  }
  func.func @transform_6(%arg0: i32) -> (i32, i32) {
    %c0_i32 = arith.constant 0 : i32
    %c0_i32_0 = arith.constant 0 : i32
    return %c0_i32, %arg0 : i32, i32
  }
}

</mosaic_0001>

<llo_original>
// kernel: tpu_custom_call.1
$region0: #{tpu_custom_call.1}
  #allocation0 [shape = 'u32[]', space=smem, size = 0x4, offset = 0x4, fixed_abs, tag = 'smem constant byte address 0x4 - core index']
  #allocation1 [shape = 'u32[144,128]{1,0:T(1,128)}', space=vmem, size = 0x12000, scoped, tag = 'internal scratch']
  %s0 = inlined_call_operand.vmem [shape: f32[128,24], index: 0, kind: input, shape index: {}]
  %s1 = inlined_call_operand.vmem [shape: bf16[64,24], index: 1, kind: input, shape index: {}]
  %s2 = inlined_call_operand.vmem [shape: bf16[64,64], index: 2, kind: input, shape index: {}]
  %s3 = inlined_call_operand.vmem [shape: bf16[64,64], index: 3, kind: input, shape index: {}]
  %s4 = inlined_call_operand.vmem [shape: f32[64,1], index: 4, kind: input, shape index: {}]
  %s5 = inlined_call_operand.vmem [shape: f32[64,4], index: 5, kind: input, shape index: {}]
  %s6 = inlined_call_operand.hbm [shape: f32[1,128], index: 6, kind: output, shape index: {}]
  %s7 = sld [smem:[#allocation0]]
  $region34: #{tpu_custom_call.1} parent=0
    _
  %s9 = ssub.s32 1, %s7
  %s10 = scalar_select 0, %s9, %s7
  $region1: #{tpu_custom_call.1} parent=0
    #allocation2 [shape = 'u8[512]{0}', space=vmem, size = 0x400, scoped, tag = 'output window, operand 0, single buffered']
    #allocation3 [shape = 's32[1]{0}', space=sflag, size = 0x4, scoped, tag = 'scoped memory for tpu_custom_call.1']
    %11 = vsyncpa [#allocation3], 0
    // Predicated region
    $region2: #{tpu_custom_call.1} parent=1 // pred_check
      _
    $region3: #{tpu_custom_call.1} parent=1 // pred_check_branch
      %13 = sbr.rel (0) target = $region5
    $region4: #{tpu_custom_call.1} parent=1 // pred_region
      _
    $region5: #{tpu_custom_call.1} parent=1 // pred_fallthru
      _
    // Predicated region
    $region6: #{tpu_custom_call.1} parent=1 // pred_check
      _
    $region7: #{tpu_custom_call.1} parent=1 // pred_check_branch
      %15 = sbr.rel (0) target = $region9
    $region8: #{tpu_custom_call.1} parent=1 // pred_region
      _
    $region9: #{tpu_custom_call.1} parent=1 // pred_fallthru
      _
    // Predicated region
    $region10: #{tpu_custom_call.1} parent=1 // pred_check
      _
    $region11: #{tpu_custom_call.1} parent=1 // pred_check_branch
      %17 = sbr.rel (0) target = $region13
    $region12: #{tpu_custom_call.1} parent=1 // pred_region
      _
    $region13: #{tpu_custom_call.1} parent=1 // pred_fallthru
      _
    // Predicated region
    $region14: #{tpu_custom_call.1} parent=1 // pred_check
      _
    $region15: #{tpu_custom_call.1} parent=1 // pred_check_branch
      %19 = sbr.rel (0) target = $region17
    $region16: #{tpu_custom_call.1} parent=1 // pred_region
      _
    $region17: #{tpu_custom_call.1} parent=1 // pred_fallthru
      _
    // Predicated region
    $region18: #{tpu_custom_call.1} parent=1 // pred_check
      _
    $region19: #{tpu_custom_call.1} parent=1 // pred_check_branch
      %21 = sbr.rel (0) target = $region21
    $region20: #{tpu_custom_call.1} parent=1 // pred_region
      _
    $region21: #{tpu_custom_call.1} parent=1 // pred_fallthru
      _
    // Predicated region
    $region22: #{tpu_custom_call.1} parent=1 // pred_check
      _
    $region23: #{tpu_custom_call.1} parent=1 // pred_check_branch
      %23 = sbr.rel (0) target = $region25
    $region24: #{tpu_custom_call.1} parent=1 // pred_region
      _
    $region25: #{tpu_custom_call.1} parent=1 // pred_fallthru
      _
    %v25 = vld [vmem:[%s0] sm:$0xff]
    %v26 = vld [vmem:[%s0 + $0x8] sm:$0xff]
    %v27 = vld [vmem:[%s0 + $0x10] sm:$0xff]
    %v28 = vld [vmem:[%s0 + $0x18] sm:$0xff]
    %v29 = vld [vmem:[%s0 + $0x20] sm:$0xff]
    %v30 = vld [vmem:[%s0 + $0x28] sm:$0xff]
    %v31 = vld [vmem:[%s0 + $0x30] sm:$0xff]
    %v32 = vld [vmem:[%s0 + $0x38] sm:$0xff]
    %v33 = vld [vmem:[%s0 + $0x40] sm:$0xff]
    %v34 = vld [vmem:[%s0 + $0x48] sm:$0xff]
    %v35 = vld [vmem:[%s0 + $0x50] sm:$0xff]
    %v36 = vld [vmem:[%s0 + $0x58] sm:$0xff]
    %v37 = vld [vmem:[%s0 + $0x60] sm:$0xff]
    %v38 = vld [vmem:[%s0 + $0x68] sm:$0xff]
    %v39 = vld [vmem:[%s0 + $0x70] sm:$0xff]
    %v40 = vld [vmem:[%s0 + $0x78] sm:$0xff]
    %v41 = vpack.c.bf16 %v26, %v25
    %v42 = vpack.c.bf16 %v28, %v27
    %v43 = vpack.c.bf16 %v30, %v29
    %v44 = vpack.c.bf16 %v32, %v31
    %v45 = vpack.c.bf16 %v34, %v33
    %v46 = vpack.c.bf16 %v36, %v35
    %v47 = vpack.c.bf16 %v38, %v37
    %v48 = vpack.c.bf16 %v40, %v39
    %v49 = vld [vmem:[%s1] sm:$0xf]
    %v50 = vld [vmem:[%s1 + $0x4] sm:$0xf]
    %v51 = vld [vmem:[%s1 + $0x8] sm:$0xf]
    %v52 = vld [vmem:[%s1 + $0xc] sm:$0xf]
    %v53 = vld [vmem:[%s1 + $0x10] sm:$0xf]
    %v54 = vld [vmem:[%s1 + $0x14] sm:$0xf]
    %v55 = vld [vmem:[%s1 + $0x18] sm:$0xf]
    %v56 = vld [vmem:[%s1 + $0x1c] sm:$0xf]
    %v57 = vld [vmem:[%s5] sm:$0xff]
    %v58 = vld [vmem:[%s5 + $0x8] sm:$0xff]
    %v59 = vld [vmem:[%s5 + $0x10] sm:$0xff]
    %v60 = vld [vmem:[%s5 + $0x18] sm:$0xff]
    %v61 = vld [vmem:[%s5 + $0x20] sm:$0xff]
    %v62 = vld [vmem:[%s5 + $0x28] sm:$0xff]
    %v63 = vld [vmem:[%s5 + $0x30] sm:$0xff]
    %v64 = vld [vmem:[%s5 + $0x38] sm:$0xff]
    %66 = vset.pattern.permute.xlu0 0
    %67 = vperm.xlu0 %66, %v57
    %v68 = vpop.permute.xlu0 %67
    %71 = vset.pattern.permute.xlu0 0
    %72 = vperm.xlu0 %71, %v58
    %v73 = vpop.permute.xlu0 %72
    %76 = vset.pattern.permute.xlu0 0
    %77 = vperm.xlu0 %76, %v59
    %v78 = vpop.permute.xlu0 %77
    %81 = vset.pattern.permute.xlu0 0
    %82 = vperm.xlu0 %81, %v60
    %v83 = vpop.permute.xlu0 %82
    %86 = vset.pattern.permute.xlu0 0
    %87 = vperm.xlu0 %86, %v61
    %v88 = vpop.permute.xlu0 %87
    %91 = vset.pattern.permute.xlu0 0
    %92 = vperm.xlu0 %91, %v62
    %v93 = vpop.permute.xlu0 %92
    %96 = vset.pattern.permute.xlu0 0
    %97 = vperm.xlu0 %96, %v63
    %v98 = vpop.permute.xlu0 %97
    %101 = vset.pattern.permute.xlu0 0
    %102 = vperm.xlu0 %101, %v64
    %v103 = vpop.permute.xlu0 %102
    %v113 = vunpack.c.l.b16 %v49
    %v114 = vunpack.c.l.b16 %v50
    %v115 = vunpack.c.l.b16 %v51
    %v116 = vunpack.c.l.b16 %v52
    %v117 = vunpack.c.l.b16 %v53
    %v118 = vunpack.c.l.b16 %v54
    %v119 = vunpack.c.l.b16 %v55
    %v120 = vunpack.c.l.b16 %v56
    %v121 = vpack.c.b16 %v114, %v113
    %v122 = vpack.c.b16 %v116, %v115
    %v123 = vpack.c.b16 %v118, %v117
    %v124 = vpack.c.b16 %v120, %v119
    %vm125 = vcmask 195584
    %v127 = vsel %vm125, %v121, 0
    %v130 = vsel %vm125, %v122, 0
    %v133 = vsel %vm125, %v123, 0
    %v136 = vsel %vm125, %v124, 0
    %v139 = vsel %vm125, %v41, 0
    %v142 = vsel %vm125, %v42, 0
    %v145 = vsel %vm125, %v43, 0
    %v148 = vsel %vm125, %v44, 0
    %v151 = vsel %vm125, %v45, 0
    %v154 = vsel %vm125, %v46, 0
    %v157 = vsel %vm125, %v47, 0
    %v160 = vsel %vm125, %v48, 0
    %162 = vmatprep.subr.bf16.mxu0 0
    %163 = vmatpush1.bf16.xpose.msra.mxu0 %v139
    %164 = vmatprep.subr.bf16.mxu0 0
    %165 = vmatpush1.bf16.xpose.msra.mxu0 %v142
    %166 = vmatprep.subr.bf16.mxu0 0
    %167 = vmatpush1.bf16.xpose.msra.mxu0 %v145
    %168 = vmatprep.subr.bf16.mxu0 0
    %169 = vmatpush1.bf16.xpose.msra.mxu0 %v148
    %170 = vmatprep.subr.bf16.mxu0 0
    %171 = vmatpush1.bf16.xpose.msra.mxu0 %v151
    %172 = vmatprep.subr.bf16.mxu0 0
    %173 = vmatpush1.bf16.xpose.msra.mxu0 %v154
    %174 = vmatprep.subr.bf16.mxu0 0
    %175 = vmatpush1.bf16.xpose.msra.mxu0 %v157
    %176 = vmatprep.subr.bf16.mxu0 0
    %177 = vmatpush1.bf16.xpose.msra.mxu0 %v160
    %178 = vmatprep.subr.bf16.mxu0 0
    %179 = vmatpush1.bf16.xpose.msra.mxu0 0
    %180 = vmatprep.subr.bf16.mxu0 0
    %181 = vmatpush1.bf16.xpose.msra.mxu0 0
    %182 = vmatprep.subr.bf16.mxu0 0
    %183 = vmatpush1.bf16.xpose.msra.mxu0 0
    %184 = vmatprep.subr.bf16.mxu0 0
    %185 = vmatpush1.bf16.xpose.msra.mxu0 0
    %186 = vmatprep.subr.bf16.mxu0 0
    %187 = vmatpush1.bf16.xpose.msra.mxu0 0
    %188 = vmatprep.subr.bf16.mxu0 0
    %189 = vmatpush1.bf16.xpose.msra.mxu0 0
    %190 = vmatprep.subr.bf16.mxu0 0
    %191 = vmatpush1.bf16.xpose.msra.mxu0 0
    %192 = vmatprep.subr.bf16.mxu0 0
    %193 = vmatpush1.bf16.xpose.msra.mxu0 0
    %194 = vmatprep.mubr.bf16.mxu0 0
    %195 = vmatmul.mubr.bf16.gmra.mrb[0].mxu0 %v127
    %v196 = vpop.f32.mrb[0].mxu0
    %v197 = vadd.f32 %v68, %v196
    %v198 = vpop.f32.mrb[0].mxu0
    %v199 = vpop.f32.mrb[0].mxu0
    %v200 = vadd.f32 %v73, %v199
    %v201 = vpop.f32.mrb[0].mxu0
    %202 = vmatprep.mubr.bf16.mxu0 0
    %203 = vmatmul.mubr.bf16.gmra.mrb[0].mxu0 %v130
    %v204 = vpop.f32.mrb[0].mxu0
    %v205 = vadd.f32 %v78, %v204
    %v206 = vpop.f32.mrb[0].mxu0
    %v207 = vpop.f32.mrb[0].mxu0
    %v208 = vadd.f32 %v83, %v207
    %v209 = vpop.f32.mrb[0].mxu0
    %210 = vmatprep.mubr.bf16.mxu0 0
    %211 = vmatmul.mubr.bf16.gmra.mrb[0].mxu0 %v133
    %v212 = vpop.f32.mrb[0].mxu0
    %v213 = vadd.f32 %v88, %v212
    %v214 = vpop.f32.mrb[0].mxu0
    %v215 = vpop.f32.mrb[0].mxu0
    %v216 = vadd.f32 %v93, %v215
    %v217 = vpop.f32.mrb[0].mxu0
    %218 = vmatprep.mubr.bf16.mxu0 0
    %219 = vmatmul.mubr.bf16.gmra.mrb[0].mxu0 %v136
    %v220 = vpop.f32.mrb[0].mxu0
    %v221 = vadd.f32 %v98, %v220
    %v222 = vpop.f32.mrb[0].mxu0
    %v223 = vpop.f32.mrb[0].mxu0
    %v224 = vadd.f32 %v103, %v223
    %v225 = vpop.f32.mrb[0].mxu0
    %226 = vdwg.mxu0
    %v227 = vpack.c.bf16 %v200, %v197
    %v228 = vpack.c.bf16 %v208, %v205
    %v229 = vpack.c.bf16 %v216, %v213
    %v230 = vpack.c.bf16 %v224, %v221
    %v231 = vtanh.bf16.pop %v227
    %v232 = vtanh.bf16.pop %v228
    %v233 = vtanh.bf16.pop %v229
    %v234 = vtanh.bf16.pop %v230
    %v235 = vld [vmem:[%s2] sm:$0xf]
    %v236 = vld [vmem:[%s2 + $0x4] sm:$0xf]
    %v237 = vld [vmem:[%s2 + $0x8] sm:$0xf]
    %v238 = vld [vmem:[%s2 + $0xc] sm:$0xf]
    %v239 = vld [vmem:[%s2 + $0x10] sm:$0xf]
    %v240 = vld [vmem:[%s2 + $0x14] sm:$0xf]
    %v241 = vld [vmem:[%s2 + $0x18] sm:$0xf]
    %v242 = vld [vmem:[%s2 + $0x1c] sm:$0xf]
    %243 = vset.pattern.permute.xlu0 1
    %244 = vperm.xlu0 %243, %v57
    %v245 = vpop.permute.xlu0 %244
    %247 = vset.pattern.permute.xlu0 1
    %248 = vperm.xlu0 %247, %v58
    %v249 = vpop.permute.xlu0 %248
    %251 = vset.pattern.permute.xlu0 1
    %252 = vperm.xlu0 %251, %v59
    %v253 = vpop.permute.xlu0 %252
    %255 = vset.pattern.permute.xlu0 1
    %256 = vperm.xlu0 %255, %v60
    %v257 = vpop.permute.xlu0 %256
    %259 = vset.pattern.permute.xlu0 1
    %260 = vperm.xlu0 %259, %v61
    %v261 = vpop.permute.xlu0 %260
    %263 = vset.pattern.permute.xlu0 1
    %264 = vperm.xlu0 %263, %v62
    %v265 = vpop.permute.xlu0 %264
    %267 = vset.pattern.permute.xlu0 1
    %268 = vperm.xlu0 %267, %v63
    %v269 = vpop.permute.xlu0 %268
    %271 = vset.pattern.permute.xlu0 1
    %272 = vperm.xlu0 %271, %v64
    %v273 = vpop.permute.xlu0 %272
    %v283 = vunpack.c.l.b16 %v235
    %v284 = vunpack.c.l.b16 %v236
    %v285 = vunpack.c.l.b16 %v237
    %v286 = vunpack.c.l.b16 %v238
    %v287 = vunpack.c.l.b16 %v239
    %v288 = vunpack.c.l.b16 %v240
    %v289 = vunpack.c.l.b16 %v241
    %v290 = vunpack.c.l.b16 %v242
    %v291 = vpack.c.b16 %v284, %v283
    %v292 = vpack.c.b16 %v286, %v285
    %v293 = vpack.c.b16 %v288, %v287
    %v294 = vpack.c.b16 %v290, %v289
    %vm295 = vcmask 523264
    %v297 = vsel %vm295, %v291, 0
    %v300 = vsel %vm295, %v292, 0
    %v303 = vsel %vm295, %v293, 0
    %v306 = vsel %vm295, %v294, 0
    %308 = vmatprep.subr.bf16.mxu0 0
    %309 = vmatpush1.bf16.msra.mxu0 %v231
    %310 = vmatprep.subr.bf16.mxu0 0
    %311 = vmatpush1.bf16.msra.mxu0 %v232
    %312 = vmatprep.subr.bf16.mxu0 0
    %313 = vmatpush1.bf16.msra.mxu0 %v233
    %314 = vmatprep.subr.bf16.mxu0 0
    %315 = vmatpush1.bf16.msra.mxu0 %v234
    %316 = vmatprep.subr.bf16.mxu0 0
    %317 = vmatpush1.bf16.msra.mxu0 0
    %318 = vmatprep.subr.bf16.mxu0 0
    %319 = vmatpush1.bf16.msra.mxu0 0
    %320 = vmatprep.subr.bf16.mxu0 0
    %321 = vmatpush1.bf16.msra.mxu0 0
    %322 = vmatprep.subr.bf16.mxu0 0
    %323 = vmatpush1.bf16.msra.mxu0 0
    %324 = vmatprep.subr.bf16.mxu0 0
    %325 = vmatpush1.bf16.msra.mxu0 0
    %326 = vmatprep.subr.bf16.mxu0 0
    %327 = vmatpush1.bf16.msra.mxu0 0
    %328 = vmatprep.subr.bf16.mxu0 0
    %329 = vmatpush1.bf16.msra.mxu0 0
    %330 = vmatprep.subr.bf16.mxu0 0
    %331 = vmatpush1.bf16.msra.mxu0 0
    %332 = vmatprep.subr.bf16.mxu0 0
    %333 = vmatpush1.bf16.msra.mxu0 0
    %334 = vmatprep.subr.bf16.mxu0 0
    %335 = vmatpush1.bf16.msra.mxu0 0
    %336 = vmatprep.subr.bf16.mxu0 0
    %337 = vmatpush1.bf16.msra.mxu0 0
    %338 = vmatprep.subr.bf16.mxu0 0
    %339 = vmatpush1.bf16.msra.mxu0 0
    %340 = vmatprep.mubr.bf16.mxu0 0
    %341 = vmatmul.mubr.bf16.gmra.mrb[0].mxu0 %v297
    %v342 = vpop.f32.mrb[0].mxu0
    %v343 = vadd.f32 %v245, %v342
    %v344 = vpop.f32.mrb[0].mxu0
    %v345 = vpop.f32.mrb[0].mxu0
    %v346 = vadd.f32 %v249, %v345
    %v347 = vpop.f32.mrb[0].mxu0
    %348 = vmatprep.mubr.bf16.mxu0 0
    %349 = vmatmul.mubr.bf16.gmra.mrb[0].mxu0 %v300
    %v350 = vpop.f32.mrb[0].mxu0
    %v351 = vadd.f32 %v253, %v350
    %v352 = vpop.f32.mrb[0].mxu0
    %v353 = vpop.f32.mrb[0].mxu0
    %v354 = vadd.f32 %v257, %v353
    %v355 = vpop.f32.mrb[0].mxu0
    %356 = vmatprep.mubr.bf16.mxu0 0
    %357 = vmatmul.mubr.bf16.gmra.mrb[0].mxu0 %v303
    %v358 = vpop.f32.mrb[0].mxu0
    %v359 = vadd.f32 %v261, %v358
    %v360 = vpop.f32.mrb[0].mxu0
    %v361 = vpop.f32.mrb[0].mxu0
    %v362 = vadd.f32 %v265, %v361
    %v363 = vpop.f32.mrb[0].mxu0
    %364 = vmatprep.mubr.bf16.mxu0 0
    %365 = vmatmul.mubr.bf16.gmra.mrb[0].mxu0 %v306
    %v366 = vpop.f32.mrb[0].mxu0
    %v367 = vadd.f32 %v269, %v366
    %v368 = vpop.f32.mrb[0].mxu0
    %v369 = vpop.f32.mrb[0].mxu0
    %v370 = vadd.f32 %v273, %v369
    %v371 = vpop.f32.mrb[0].mxu0
    %372 = vdwg.mxu0
    %v373 = vpack.c.bf16 %v346, %v343
    %v374 = vpack.c.bf16 %v354, %v351
    %v375 = vpack.c.bf16 %v362, %v359
    %v376 = vpack.c.bf16 %v370, %v367
    %v377 = vtanh.bf16.pop %v373
    %v378 = vtanh.bf16.pop %v374
    %v379 = vtanh.bf16.pop %v375
    %v380 = vtanh.bf16.pop %v376
    %v381 = vld [vmem:[%s3] sm:$0xf]
    %v382 = vld [vmem:[%s3 + $0x4] sm:$0xf]
    %v383 = vld [vmem:[%s3 + $0x8] sm:$0xf]
    %v384 = vld [vmem:[%s3 + $0xc] sm:$0xf]
    %v385 = vld [vmem:[%s3 + $0x10] sm:$0xf]
    %v386 = vld [vmem:[%s3 + $0x14] sm:$0xf]
    %v387 = vld [vmem:[%s3 + $0x18] sm:$0xf]
    %v388 = vld [vmem:[%s3 + $0x1c] sm:$0xf]
    %389 = vset.pattern.permute.xlu0 2
    %390 = vperm.xlu0 %389, %v57
    %v391 = vpop.permute.xlu0 %390
    %393 = vset.pattern.permute.xlu0 2
    %394 = vperm.xlu0 %393, %v58
    %v395 = vpop.permute.xlu0 %394
    %397 = vset.pattern.permute.xlu0 2
    %398 = vperm.xlu0 %397, %v59
    %v399 = vpop.permute.xlu0 %398
    %401 = vset.pattern.permute.xlu0 2
    %402 = vperm.xlu0 %401, %v60
    %v403 = vpop.permute.xlu0 %402
    %405 = vset.pattern.permute.xlu0 2
    %406 = vperm.xlu0 %405, %v61
    %v407 = vpop.permute.xlu0 %406
    %409 = vset.pattern.permute.xlu0 2
    %410 = vperm.xlu0 %409, %v62
    %v411 = vpop.permute.xlu0 %410
    %413 = vset.pattern.permute.xlu0 2
    %414 = vperm.xlu0 %413, %v63
    %v415 = vpop.permute.xlu0 %414
    %417 = vset.pattern.permute.xlu0 2
    %418 = vperm.xlu0 %417, %v64
    %v419 = vpop.permute.xlu0 %418
    %v429 = vunpack.c.l.b16 %v381
    %v430 = vunpack.c.l.b16 %v382
    %v431 = vunpack.c.l.b16 %v383
    %v432 = vunpack.c.l.b16 %v384
    %v433 = vunpack.c.l.b16 %v385
    %v434 = vunpack.c.l.b16 %v386
    %v435 = vunpack.c.l.b16 %v387
    %v436 = vunpack.c.l.b16 %v388
    %v437 = vpack.c.b16 %v430, %v429
    %v438 = vpack.c.b16 %v432, %v431
    %v439 = vpack.c.b16 %v434, %v433
    %v440 = vpack.c.b16 %v436, %v435
    %v442 = vsel %vm295, %v437, 0
    %v445 = vsel %vm295, %v438, 0
    %v448 = vsel %vm295, %v439, 0
    %v451 = vsel %vm295, %v440, 0
    %453 = vmatprep.subr.bf16.mxu0 0
    %454 = vmatpush1.bf16.msra.mxu0 %v377
    %455 = vmatprep.subr.bf16.mxu0 0
    %456 = vmatpush1.bf16.msra.mxu0 %v378
    %457 = vmatprep.subr.bf16.mxu0 0
    %458 = vmatpush1.bf16.msra.mxu0 %v379
    %459 = vmatprep.subr.bf16.mxu0 0
    %460 = vmatpush1.bf16.msra.mxu0 %v380
    %461 = vmatprep.subr.bf16.mxu0 0
    %462 = vmatpush1.bf16.msra.mxu0 0
    %463 = vmatprep.subr.bf16.mxu0 0
    %464 = vmatpush1.bf16.msra.mxu0 0
    %465 = vmatprep.subr.bf16.mxu0 0
    %466 = vmatpush1.bf16.msra.mxu0 0
    %467 = vmatprep.subr.bf16.mxu0 0
    %468 = vmatpush1.bf16.msra.mxu0 0
    %469 = vmatprep.subr.bf16.mxu0 0
    %470 = vmatpush1.bf16.msra.mxu0 0
    %471 = vmatprep.subr.bf16.mxu0 0
    %472 = vmatpush1.bf16.msra.mxu0 0
    %473 = vmatprep.subr.bf16.mxu0 0
    %474 = vmatpush1.bf16.msra.mxu0 0
    %475 = vmatprep.subr.bf16.mxu0 0
    %476 = vmatpush1.bf16.msra.mxu0 0
    %477 = vmatprep.subr.bf16.mxu0 0
    %478 = vmatpush1.bf16.msra.mxu0 0
    %479 = vmatprep.subr.bf16.mxu0 0
    %480 = vmatpush1.bf16.msra.mxu0 0
    %481 = vmatprep.subr.bf16.mxu0 0
    %482 = vmatpush1.bf16.msra.mxu0 0
    %483 = vmatprep.subr.bf16.mxu0 0
    %484 = vmatpush1.bf16.msra.mxu0 0
    %485 = vmatprep.mubr.bf16.mxu0 0
    %486 = vmatmul.mubr.bf16.gmra.mrb[0].mxu0 %v442
    %v487 = vpop.f32.mrb[0].mxu0
    %v488 = vadd.f32 %v391, %v487
    %v489 = vpop.f32.mrb[0].mxu0
    %v490 = vpop.f32.mrb[0].mxu0
    %v491 = vadd.f32 %v395, %v490
    %v492 = vpop.f32.mrb[0].mxu0
    %493 = vmatprep.mubr.bf16.mxu0 0
    %494 = vmatmul.mubr.bf16.gmra.mrb[0].mxu0 %v445
    %v495 = vpop.f32.mrb[0].mxu0
    %v496 = vadd.f32 %v399, %v495
    %v497 = vpop.f32.mrb[0].mxu0
    %v498 = vpop.f32.mrb[0].mxu0
    %v499 = vadd.f32 %v403, %v498
    %v500 = vpop.f32.mrb[0].mxu0
    %501 = vmatprep.mubr.bf16.mxu0 0
    %502 = vmatmul.mubr.bf16.gmra.mrb[0].mxu0 %v448
    %v503 = vpop.f32.mrb[0].mxu0
    %v504 = vadd.f32 %v407, %v503
    %v505 = vpop.f32.mrb[0].mxu0
    %v506 = vpop.f32.mrb[0].mxu0
    %v507 = vadd.f32 %v411, %v506
    %v508 = vpop.f32.mrb[0].mxu0
    %509 = vmatprep.mubr.bf16.mxu0 0
    %510 = vmatmul.mubr.bf16.gmra.mrb[0].mxu0 %v451
    %v511 = vpop.f32.mrb[0].mxu0
    %v512 = vadd.f32 %v415, %v511
    %v513 = vpop.f32.mrb[0].mxu0
    %v514 = vpop.f32.mrb[0].mxu0
    %v515 = vadd.f32 %v419, %v514
    %v516 = vpop.f32.mrb[0].mxu0
    %517 = vdwg.mxu0
    %v518 = vpack.c.bf16 %v491, %v488
    %v519 = vpack.c.bf16 %v499, %v496
    %v520 = vpack.c.bf16 %v507, %v504
    %v521 = vpack.c.bf16 %v515, %v512
    %v522 = vtanh.bf16.pop %v518
    %v523 = vtanh.bf16.pop %v519
    %v524 = vtanh.bf16.pop %v520
    %v525 = vtanh.bf16.pop %v521
    %v526 = vld [vmem:[%s4] sm:$0xff]
    %v527 = vld [vmem:[%s4 + $0x8] sm:$0xff]
    %v528 = vld [vmem:[%s4 + $0x10] sm:$0xff]
    %v529 = vld [vmem:[%s4 + $0x18] sm:$0xff]
    %v530 = vld [vmem:[%s4 + $0x20] sm:$0xff]
    %v531 = vld [vmem:[%s4 + $0x28] sm:$0xff]
    %v532 = vld [vmem:[%s4 + $0x30] sm:$0xff]
    %v533 = vld [vmem:[%s4 + $0x38] sm:$0xff]
    %v534 = vunpack.c.l.bf16 %v522
    %v535 = vunpack.c.h.bf16 %v522
    %v536 = vunpack.c.l.bf16 %v523
    %v537 = vunpack.c.h.bf16 %v523
    %v538 = vunpack.c.l.bf16 %v524
    %v539 = vunpack.c.h.bf16 %v524
    %v540 = vunpack.c.l.bf16 %v525
    %v541 = vunpack.c.h.bf16 %v525
    %543 = vset.pattern.permute.xlu0 0
    %544 = vperm.xlu0 %543, %v526
    %v545 = vpop.permute.xlu0 %544
    %548 = vset.pattern.permute.xlu0 0
    %549 = vperm.xlu0 %548, %v527
    %v550 = vpop.permute.xlu0 %549
    %553 = vset.pattern.permute.xlu0 0
    %554 = vperm.xlu0 %553, %v528
    %v555 = vpop.permute.xlu0 %554
    %558 = vset.pattern.permute.xlu0 0
    %559 = vperm.xlu0 %558, %v529
    %v560 = vpop.permute.xlu0 %559
    %563 = vset.pattern.permute.xlu0 0
    %564 = vperm.xlu0 %563, %v530
    %v565 = vpop.permute.xlu0 %564
    %568 = vset.pattern.permute.xlu0 0
    %569 = vperm.xlu0 %568, %v531
    %v570 = vpop.permute.xlu0 %569
    %573 = vset.pattern.permute.xlu0 0
    %574 = vperm.xlu0 %573, %v532
    %v575 = vpop.permute.xlu0 %574
    %578 = vset.pattern.permute.xlu0 0
    %579 = vperm.xlu0 %578, %v533
    %v580 = vpop.permute.xlu0 %579
    %v582 = vmul.f32 %v545, %v534
    %v583 = vmul.f32 %v550, %v535
    %v584 = vmul.f32 %v555, %v536
    %v585 = vmul.f32 %v560, %v537
    %v586 = vmul.f32 %v565, %v538
    %v587 = vmul.f32 %v570, %v539
    %v588 = vmul.f32 %v575, %v540
    %v589 = vmul.f32 %v580, %v541
    %v590 = vadd.f32 %v582, %v583
    %v591 = vadd.f32 %v590, %v584
    %v592 = vadd.f32 %v591, %v585
    %v593 = vadd.f32 %v592, %v586
    %v594 = vadd.f32 %v593, %v587
    %v595 = vadd.f32 %v594, %v588
    %v596 = vadd.f32 %v595, %v589
    %v597 = vrot.slane %v596, 4
    %v598 = vadd.f32 %v596, %v597
    %v599 = vrot.slane %v598, 2
    %v600 = vadd.f32 %v598, %v599
    %v601 = vrot.slane %v600, 1
    %v602 = vadd.f32 %v600, %v601
    %v603 = vld [vmem:[%s5] sm:$0x1]
    %605 = vset.pattern.permute.xlu0 3
    %606 = vperm.xlu0 %605, %v603
    %v607 = vpop.permute.xlu0 %606
    %v609 = vadd.f32 %v602, %v607
    %610 = vst [vmem:[#allocation2] sm:$0x1] %v609
    // Predicated region
    $region26: #{tpu_custom_call.1} parent=1 // pred_check
      _
    $region27: #{tpu_custom_call.1} parent=1 // pred_check_branch
      %612 = sbr.rel (0) target = $region29
    $region28: #{tpu_custom_call.1} parent=1 // pred_region
      %s614 = ssub.s32 16, 16
      %615 = vsyncadd [#allocation3], %s614
      %s617 = sshll.u32 [#allocation2], 4
      %s618 = int_to_ptr.vmem [resolvable:$true] %s617
      %620 = dma.vmem_to_hbm [thread:$0]  %s618, 16, %s6, [#allocation3]
    $region29: #{tpu_custom_call.1} parent=1 // pred_fallthru
      _
    // Predicated region
    $region30: #{tpu_custom_call.1} parent=1 // pred_check
      _
    $region31: #{tpu_custom_call.1} parent=1 // pred_check_branch
      %622 = sbr.rel (0) target = $region33
    $region32: #{tpu_custom_call.1} parent=1 // pred_region
      %623 = dma.done [#allocation3], 16
    $region33: #{tpu_custom_call.1} parent=1 // pred_fallthru
      _
    %624 = vsyncpa [#allocation3], 1

</llo_original>
